<compile_context>
chip_gen: v6e
topology: v6e:2x2x1
jax: 0.10.0
libtpu: 0.0.40
codegen_flags: <defaults>
</compile_context>

<pallas_src>
import functools

import jax
import jax.numpy as jnp
import numpy as np
from jax.experimental import pallas as pl
from jax.experimental.pallas import tpu as pltpu


# =============================================================================
# Fused ResnetBlock kernel: one image per grid step, everything in VMEM.
# =============================================================================
def _resnet_block_kernel(x_ref, mask_ref, w1_ref, b1_ref, w2_ref, b2_ref,
                         o_ref, buf_ref, *, wp, npad, margin, inv_n, eps):
    # x_ref:    (1, C, npad)   zero-padded image, padded spatial flattened on lanes
    # mask_ref: (1, npad)      1.0 on interior pixels, 0.0 on the padded border
    # w*_ref:   (C, 9*C)       packed conv weights, columns ordered (kh, kw, cin)
    # b*_ref:   (C, 1)
    # o_ref:    (1, C, npad)
    # buf_ref:  (C, npad + 2*margin) VMEM scratch with zero margins for tap shifts
    buf_ref[...] = jnp.zeros_like(buf_ref)        # margins must be zero every step
    mask = mask_ref[...]                          # (1, npad)
    x = x_ref[0]                                  # (C, npad), zero border

    def conv3x3_instnorm(src, w, b):
        # src: (C, npad) activation in padded layout with a zero border.
        buf_ref[:, margin:margin + npad] = src
        taps = []
        for kh in range(3):
            for kw in range(3):
                off = margin + (kh - 1) * wp + (kw - 1)
                taps.append(buf_ref[:, off:off + npad])
        x9 = jnp.concatenate(taps, axis=0)        # (9*C, npad), all in VMEM
        # Single fused-K matmul on the MXU; f32 accumulation, default precision.
        y = jnp.dot(w, x9, preferred_element_type=jnp.float32) + b
        # InstanceNorm2d (biased variance), statistics over interior pixels only.
        mean = jnp.sum(y * mask, axis=1, keepdims=True) * inv_n
        cen = y - mean
        var = jnp.sum(cen * cen * mask, axis=1, keepdims=True) * inv_n
        return cen * jax.lax.rsqrt(var + eps)

    y1 = conv3x3_instnorm(x, w1_ref[...], b1_ref[...])
    z = jnp.maximum(y1, 0.0) * mask               # ReLU; re-zero border (= zero pad)
    y2 = conv3x3_instnorm(z, w2_ref[...], b2_ref[...])
    o_ref[0] = x + y2 * mask                      # skip connection; border stays 0


def resnet_block_forward(x_nchw, params, *, eps=1e-5):
    """ResnetBlock forward on an NCHW float32 tensor via one fused Pallas kernel."""
    w1, b1, w2, b2 = params
    B, C, H, W = x_nchw.shape
    Hp, Wp = H + 2, W + 2
    npad = Hp * Wp
    margin = Wp + 1                               # max |tap shift| in flat coords

    # Layout glue: zero-pad spatially once, flatten padded spatial onto lanes.
    xp = jnp.pad(x_nchw, ((0, 0), (0, 0), (1, 1), (1, 1))).reshape(B, C, npad)
    mask = jnp.pad(jnp.ones((H, W), jnp.float32), 1).reshape(1, npad)

    # Packed weights: (Cout, Cin, 3, 3) -> (Cout, kh, kw, Cin) -> (Cout, 9*Cin).
    w1p = jnp.transpose(w1, (0, 2, 3, 1)).reshape(C, 9 * C).astype(jnp.float32)
    w2p = jnp.transpose(w2, (0, 2, 3, 1)).reshape(C, 9 * C).astype(jnp.float32)
    b1c = b1.reshape(C, 1).astype(jnp.float32)
    b2c = b2.reshape(C, 1).astype(jnp.float32)

    kernel = functools.partial(
        _resnet_block_kernel, wp=Wp, npad=npad, margin=margin,
        inv_n=1.0 / float(H * W), eps=float(eps))

    out_pad = pl.pallas_call(
        kernel,
        out_shape=jax.ShapeDtypeStruct((B, C, npad), jnp.float32),
        grid=(B,),
        in_specs=[
            pl.BlockSpec((1, C, npad), lambda b: (b, 0, 0)),
            pl.BlockSpec((1, npad), lambda b: (0, 0)),
            pl.BlockSpec((C, 9 * C), lambda b: (0, 0)),
            pl.BlockSpec((C, 1), lambda b: (0, 0)),
            pl.BlockSpec((C, 9 * C), lambda b: (0, 0)),
            pl.BlockSpec((C, 1), lambda b: (0, 0)),
        ],
        out_specs=pl.BlockSpec((1, C, npad), lambda b: (b, 0, 0)),
        scratch_shapes=[pltpu.VMEM((C, npad + 2 * margin), jnp.float32)],
        compiler_params=pltpu.CompilerParams(
            dimension_semantics=("parallel",)),
    )(xp, mask, w1p, b1c, w2p, b2c)

    # Single interior slice back to (B, C, H, W); the kernel output is lane-dense.
    return out_pad.reshape(B, C, Hp, Wp)[:, :, 1:-1, 1:-1]


# =============================================================================
# Pure-XLA reference for validation.
# =============================================================================
def _ref_instance_norm(y, eps=1e-5):
    mean = jnp.mean(y, axis=(2, 3), keepdims=True)
    var = jnp.mean((y - mean) ** 2, axis=(2, 3), keepdims=True)
    return (y - mean) * jax.lax.rsqrt(var + eps)


def reference_forward(x_nchw, params, *, eps=1e-5):
    w1, b1, w2, b2 = params

    def conv(x, w, b):
        y = jax.lax.conv_general_dilated(
            x, w, window_strides=(1, 1), padding=((1, 1), (1, 1)),
            dimension_numbers=("NCHW", "OIHW", "NCHW"))
        return y + b.reshape(1, -1, 1, 1)

    y = _ref_instance_norm(conv(x_nchw, w1, b1), eps)
    y = jnp.maximum(y, 0.0)
    y = _ref_instance_norm(conv(y, w2, b2), eps)
    return x_nchw + y


if __name__ == "__main__":
    key = jax.random.PRNGKey(0)
    B, dim, H, W = 2, 8, 16, 16

    k1, k2, k3, k4, k5 = jax.random.split(key, 5)
    w1 = 0.1 * jax.random.normal(k1, (dim, dim, 3, 3), jnp.float32)
    b1 = 0.1 * jax.random.normal(k2, (dim,), jnp.float32)
    w2 = 0.1 * jax.random.normal(k3, (dim, dim, 3, 3), jnp.float32)
    b2 = 0.1 * jax.random.normal(k4, (dim,), jnp.float32)
    x = jax.random.normal(k5, (B, dim, H, W), jnp.float32)
    params = (w1, b1, w2, b2)

    y = jax.block_until_ready(resnet_block_forward(x, params))
    y_ref = jax.block_until_ready(reference_forward(x, params))

    assert y.shape == (B, dim, H, W)
    # Both kernel and reference use the default (fast) MXU precision, hence the
    # bf16-class tolerance; algorithmic errors would show up at O(1).
    np.testing.assert_allclose(np.asarray(y), np.asarray(y_ref),
                               rtol=2e-2, atol=2e-2)

    print("KERNEL_OK")
</pallas_src>

<mosaic_0001>
module attributes {stable_mosaic.version = 11 : i64} {
  func.func @_resnet_block_kernel(%arg0: i32, %arg1: memref<1x8x324xf32, #tpu.memory_space<vmem>>, %arg2: memref<1x324xf32, #tpu.memory_space<vmem>>, %arg3: memref<8x72xf32, #tpu.memory_space<vmem>>, %arg4: memref<8x1xf32, #tpu.memory_space<vmem>>, %arg5: memref<8x72xf32, #tpu.memory_space<vmem>>, %arg6: memref<8x1xf32, #tpu.memory_space<vmem>>, %arg7: memref<1x8x324xf32, #tpu.memory_space<vmem>>, %arg8: memref<8x362xf32, #tpu.memory_space<vmem>>) attributes {dimension_semantics = [#tpu.dimension_semantics<parallel>], iteration_bounds = array<i64: 2>, scalar_prefetch = 0 : i64, scratch_operands = 1 : i64, tpu.core_type = #tpu.core_type<tc>, window_params = [{transform_indices = @transform_0, window_bounds = array<i64: 1, 8, 324>}, {pipeline_mode = #tpu.pipeline_mode<synchronous>, transform_indices = @transform_1, window_bounds = array<i64: 1, 324>}, {pipeline_mode = #tpu.pipeline_mode<synchronous>, transform_indices = @transform_2, window_bounds = array<i64: 8, 72>}, {pipeline_mode = #tpu.pipeline_mode<synchronous>, transform_indices = @transform_3, window_bounds = array<i64: 8, 1>}, {pipeline_mode = #tpu.pipeline_mode<synchronous>, transform_indices = @transform_4, window_bounds = array<i64: 8, 72>}, {pipeline_mode = #tpu.pipeline_mode<synchronous>, transform_indices = @transform_5, window_bounds = array<i64: 8, 1>}, {transform_indices = @transform_6, window_bounds = array<i64: 1, 8, 324>}]} {
    %cst = arith.constant 0.000000e+00 : f32
    %0 = vector.broadcast %cst : f32 to vector<8x362xf32>
    %c0 = arith.constant 0 : index
    %c0_0 = arith.constant 0 : index
    %1 = vector.load %arg8[%c0, %c0_0] : memref<8x362xf32, #tpu.memory_space<vmem>>, vector<8x362xf32>
    tpu.vector_store %arg8[%c0, %c0_0], %0 {strides = array<i32>} : memref<8x362xf32, #tpu.memory_space<vmem>>, vector<8x362xf32>,
    %c0_1 = arith.constant 0 : index
    %c0_2 = arith.constant 0 : index
    %2 = vector.load %arg2[%c0_1, %c0_2] : memref<1x324xf32, #tpu.memory_space<vmem>>, vector<1x324xf32>
    %c0_3 = arith.constant 0 : index
    %c0_4 = arith.constant 0 : index
    %c0_5 = arith.constant 0 : index
    %3 = vector.load %arg1[%c0_3, %c0_4, %c0_5] : memref<1x8x324xf32, #tpu.memory_space<vmem>>, vector<1x8x324xf32>
    %4 = vector.shape_cast %3 : vector<1x8x324xf32> to vector<8x324xf32>
    %c0_6 = arith.constant 0 : index
    %c0_7 = arith.constant 0 : index
    %5 = vector.load %arg3[%c0_6, %c0_7] : memref<8x72xf32, #tpu.memory_space<vmem>>, vector<8x72xf32>
    %c0_8 = arith.constant 0 : index
    %c0_9 = arith.constant 0 : index
    %6 = vector.load %arg4[%c0_8, %c0_9] : memref<8x1xf32, #tpu.memory_space<vmem>>, vector<8x1xf32>
    %c0_10 = arith.constant 0 : index
    %c19 = arith.constant 19 : index
    %7 = vector.load %arg8[%c0_10, %c19] : memref<8x362xf32, #tpu.memory_space<vmem>>, vector<8x324xf32>
    tpu.vector_store %arg8[%c0_10, %c19], %4 {strides = array<i32>} : memref<8x362xf32, #tpu.memory_space<vmem>>, vector<8x324xf32>,
    %c0_11 = arith.constant 0 : index
    %c0_12 = arith.constant 0 : index
    %8 = vector.load %arg8[%c0_11, %c0_12] : memref<8x362xf32, #tpu.memory_space<vmem>>, vector<8x324xf32>
    %c0_13 = arith.constant 0 : index
    %c1 = arith.constant 1 : index
    %9 = vector.load %arg8[%c0_13, %c1] : memref<8x362xf32, #tpu.memory_space<vmem>>, vector<8x324xf32>
    %c0_14 = arith.constant 0 : index
    %c2 = arith.constant 2 : index
    %10 = vector.load %arg8[%c0_14, %c2] : memref<8x362xf32, #tpu.memory_space<vmem>>, vector<8x324xf32>
    %c0_15 = arith.constant 0 : index
    %c18 = arith.constant 18 : index
    %11 = vector.load %arg8[%c0_15, %c18] : memref<8x362xf32, #tpu.memory_space<vmem>>, vector<8x324xf32>
    %c0_16 = arith.constant 0 : index
    %c19_17 = arith.constant 19 : index
    %12 = vector.load %arg8[%c0_16, %c19_17] : memref<8x362xf32, #tpu.memory_space<vmem>>, vector<8x324xf32>
    %c0_18 = arith.constant 0 : index
    %c20 = arith.constant 20 : index
    %13 = vector.load %arg8[%c0_18, %c20] : memref<8x362xf32, #tpu.memory_space<vmem>>, vector<8x324xf32>
    %c0_19 = arith.constant 0 : index
    %c36 = arith.constant 36 : index
    %14 = vector.load %arg8[%c0_19, %c36] : memref<8x362xf32, #tpu.memory_space<vmem>>, vector<8x324xf32>
    %c0_20 = arith.constant 0 : index
    %c37 = arith.constant 37 : index
    %15 = vector.load %arg8[%c0_20, %c37] : memref<8x362xf32, #tpu.memory_space<vmem>>, vector<8x324xf32>
    %c0_21 = arith.constant 0 : index
    %c38 = arith.constant 38 : index
    %16 = vector.load %arg8[%c0_21, %c38] : memref<8x362xf32, #tpu.memory_space<vmem>>, vector<8x324xf32>
    %17 = tpu.concatenate %8, %9, %10, %11, %12, %13, %14, %15, %16 in 0 : vector<8x324xf32>, vector<8x324xf32>, vector<8x324xf32>, vector<8x324xf32>, vector<8x324xf32>, vector<8x324xf32>, vector<8x324xf32>, vector<8x324xf32>, vector<8x324xf32> -> vector<72x324xf32>
    %cst_22 = arith.constant dense<0.000000e+00> : vector<8x324xf32>
    %18 = tpu.matmul %5, %17, %cst_22 {dimension_numbers = #tpu.dot_dimension_numbers<[1], [0], [0], [1], [0, 0, 1, 1], [], []>} : vector<8x72xf32>, vector<72x324xf32>, vector<8x324xf32> -> vector<8x324xf32>
    %19 = vector.broadcast %6 : vector<8x1xf32> to vector<8x324xf32>
    %20 = arith.addf %18, %19 : vector<8x324xf32>
    %21 = vector.broadcast %2 : vector<1x324xf32> to vector<8x324xf32>
    %22 = arith.mulf %20, %21 : vector<8x324xf32>
    %cst_23 = arith.constant dense<0.000000e+00> : vector<8xf32>
    %23 = vector.multi_reduction <add>, %22, %cst_23 [1] : vector<8x324xf32> to vector<8xf32>
    %24 = vector.shape_cast %23 : vector<8xf32> to vector<8x1xf32>
    %cst_24 = arith.constant 3.906250e-03 : f32
    %25 = vector.broadcast %cst_24 : f32 to vector<8x1xf32>
    %26 = arith.mulf %24, %25 : vector<8x1xf32>
    %27 = vector.broadcast %26 : vector<8x1xf32> to vector<8x324xf32>
    %28 = arith.subf %20, %27 : vector<8x324xf32>
    %29 = arith.mulf %28, %28 : vector<8x324xf32>
    %30 = vector.broadcast %2 : vector<1x324xf32> to vector<8x324xf32>
    %31 = arith.mulf %29, %30 : vector<8x324xf32>
    %cst_25 = arith.constant dense<0.000000e+00> : vector<8xf32>
    %32 = vector.multi_reduction <add>, %31, %cst_25 [1] : vector<8x324xf32> to vector<8xf32>
    %33 = vector.shape_cast %32 : vector<8xf32> to vector<8x1xf32>
    %cst_26 = arith.constant 3.906250e-03 : f32
    %34 = vector.broadcast %cst_26 : f32 to vector<8x1xf32>
    %35 = arith.mulf %33, %34 : vector<8x1xf32>
    %cst_27 = arith.constant 9.99999974E-6 : f32
    %36 = vector.broadcast %cst_27 : f32 to vector<8x1xf32>
    %37 = arith.addf %35, %36 : vector<8x1xf32>
    %38 = math.rsqrt %37 : vector<8x1xf32>
    %39 = vector.broadcast %38 : vector<8x1xf32> to vector<8x324xf32>
    %40 = arith.mulf %28, %39 : vector<8x324xf32>
    %cst_28 = arith.constant 0.000000e+00 : f32
    %41 = vector.broadcast %cst_28 : f32 to vector<8x324xf32>
    %42 = arith.maximumf %40, %41 : vector<8x324xf32>
    %43 = vector.broadcast %2 : vector<1x324xf32> to vector<8x324xf32>
    %44 = arith.mulf %42, %43 : vector<8x324xf32>
    %c0_29 = arith.constant 0 : index
    %c0_30 = arith.constant 0 : index
    %45 = vector.load %arg5[%c0_29, %c0_30] : memref<8x72xf32, #tpu.memory_space<vmem>>, vector<8x72xf32>
    %c0_31 = arith.constant 0 : index
    %c0_32 = arith.constant 0 : index
    %46 = vector.load %arg6[%c0_31, %c0_32] : memref<8x1xf32, #tpu.memory_space<vmem>>, vector<8x1xf32>
    %c0_33 = arith.constant 0 : index
    %c19_34 = arith.constant 19 : index
    %47 = vector.load %arg8[%c0_33, %c19_34] : memref<8x362xf32, #tpu.memory_space<vmem>>, vector<8x324xf32>
    tpu.vector_store %arg8[%c0_33, %c19_34], %44 {strides = array<i32>} : memref<8x362xf32, #tpu.memory_space<vmem>>, vector<8x324xf32>,
    %c0_35 = arith.constant 0 : index
    %c0_36 = arith.constant 0 : index
    %48 = vector.load %arg8[%c0_35, %c0_36] : memref<8x362xf32, #tpu.memory_space<vmem>>, vector<8x324xf32>
    %c0_37 = arith.constant 0 : index
    %c1_38 = arith.constant 1 : index
    %49 = vector.load %arg8[%c0_37, %c1_38] : memref<8x362xf32, #tpu.memory_space<vmem>>, vector<8x324xf32>
    %c0_39 = arith.constant 0 : index
    %c2_40 = arith.constant 2 : index
    %50 = vector.load %arg8[%c0_39, %c2_40] : memref<8x362xf32, #tpu.memory_space<vmem>>, vector<8x324xf32>
    %c0_41 = arith.constant 0 : index
    %c18_42 = arith.constant 18 : index
    %51 = vector.load %arg8[%c0_41, %c18_42] : memref<8x362xf32, #tpu.memory_space<vmem>>, vector<8x324xf32>
    %c0_43 = arith.constant 0 : index
    %c19_44 = arith.constant 19 : index
    %52 = vector.load %arg8[%c0_43, %c19_44] : memref<8x362xf32, #tpu.memory_space<vmem>>, vector<8x324xf32>
    %c0_45 = arith.constant 0 : index
    %c20_46 = arith.constant 20 : index
    %53 = vector.load %arg8[%c0_45, %c20_46] : memref<8x362xf32, #tpu.memory_space<vmem>>, vector<8x324xf32>
    %c0_47 = arith.constant 0 : index
    %c36_48 = arith.constant 36 : index
    %54 = vector.load %arg8[%c0_47, %c36_48] : memref<8x362xf32, #tpu.memory_space<vmem>>, vector<8x324xf32>
    %c0_49 = arith.constant 0 : index
    %c37_50 = arith.constant 37 : index
    %55 = vector.load %arg8[%c0_49, %c37_50] : memref<8x362xf32, #tpu.memory_space<vmem>>, vector<8x324xf32>
    %c0_51 = arith.constant 0 : index
    %c38_52 = arith.constant 38 : index
    %56 = vector.load %arg8[%c0_51, %c38_52] : memref<8x362xf32, #tpu.memory_space<vmem>>, vector<8x324xf32>
    %57 = tpu.concatenate %48, %49, %50, %51, %52, %53, %54, %55, %56 in 0 : vector<8x324xf32>, vector<8x324xf32>, vector<8x324xf32>, vector<8x324xf32>, vector<8x324xf32>, vector<8x324xf32>, vector<8x324xf32>, vector<8x324xf32>, vector<8x324xf32> -> vector<72x324xf32>
    %cst_53 = arith.constant dense<0.000000e+00> : vector<8x324xf32>
    %58 = tpu.matmul %45, %57, %cst_53 {dimension_numbers = #tpu.dot_dimension_numbers<[1], [0], [0], [1], [0, 0, 1, 1], [], []>} : vector<8x72xf32>, vector<72x324xf32>, vector<8x324xf32> -> vector<8x324xf32>
    %59 = vector.broadcast %46 : vector<8x1xf32> to vector<8x324xf32>
    %60 = arith.addf %58, %59 : vector<8x324xf32>
    %61 = vector.broadcast %2 : vector<1x324xf32> to vector<8x324xf32>
    %62 = arith.mulf %60, %61 : vector<8x324xf32>
    %cst_54 = arith.constant dense<0.000000e+00> : vector<8xf32>
    %63 = vector.multi_reduction <add>, %62, %cst_54 [1] : vector<8x324xf32> to vector<8xf32>
    %64 = vector.shape_cast %63 : vector<8xf32> to vector<8x1xf32>
    %cst_55 = arith.constant 3.906250e-03 : f32
    %65 = vector.broadcast %cst_55 : f32 to vector<8x1xf32>
    %66 = arith.mulf %64, %65 : vector<8x1xf32>
    %67 = vector.broadcast %66 : vector<8x1xf32> to vector<8x324xf32>
    %68 = arith.subf %60, %67 : vector<8x324xf32>
    %69 = arith.mulf %68, %68 : vector<8x324xf32>
    %70 = vector.broadcast %2 : vector<1x324xf32> to vector<8x324xf32>
    %71 = arith.mulf %69, %70 : vector<8x324xf32>
    %cst_56 = arith.constant dense<0.000000e+00> : vector<8xf32>
    %72 = vector.multi_reduction <add>, %71, %cst_56 [1] : vector<8x324xf32> to vector<8xf32>
    %73 = vector.shape_cast %72 : vector<8xf32> to vector<8x1xf32>
    %cst_57 = arith.constant 3.906250e-03 : f32
    %74 = vector.broadcast %cst_57 : f32 to vector<8x1xf32>
    %75 = arith.mulf %73, %74 : vector<8x1xf32>
    %cst_58 = arith.constant 9.99999974E-6 : f32
    %76 = vector.broadcast %cst_58 : f32 to vector<8x1xf32>
    %77 = arith.addf %75, %76 : vector<8x1xf32>
    %78 = math.rsqrt %77 : vector<8x1xf32>
    %79 = vector.broadcast %78 : vector<8x1xf32> to vector<8x324xf32>
    %80 = arith.mulf %68, %79 : vector<8x324xf32>
    %81 = vector.broadcast %2 : vector<1x324xf32> to vector<8x324xf32>
    %82 = arith.mulf %80, %81 : vector<8x324xf32>
    %83 = arith.addf %4, %82 : vector<8x324xf32>
    %c0_59 = arith.constant 0 : index
    %c0_60 = arith.constant 0 : index
    %c0_61 = arith.constant 0 : index
    %84 = vector.load %arg7[%c0_59, %c0_60, %c0_61] : memref<1x8x324xf32, #tpu.memory_space<vmem>>, vector<1x8x324xf32>
    %85 = vector.shape_cast %84 : vector<1x8x324xf32> to vector<8x324xf32>
    %86 = vector.shape_cast %83 : vector<8x324xf32> to vector<1x8x324xf32>
    tpu.vector_store %arg7[%c0_59, %c0_60, %c0_61], %86 {strides = array<i32>} : memref<1x8x324xf32, #tpu.memory_space<vmem>>, vector<1x8x324xf32>,
    return
  }
  func.func @transform_0(%arg0: i32) -> (i32, i32, i32) {
    %c0_i32 = arith.constant 0 : i32
    %c0_i32_0 = arith.constant 0 : i32
    %c0_i32_1 = arith.constant 0 : i32
    return %arg0, %c0_i32, %c0_i32_0 : i32, i32, i32
  }
  func.func @transform_1(%arg0: i32) -> (i32, i32) {
    %c0_i32 = arith.constant 0 : i32
    %c0_i32_0 = arith.constant 0 : i32
    %c0_i32_1 = arith.constant 0 : i32
    return %c0_i32, %c0_i32_0 : i32, i32
  }
  func.func @transform_2(%arg0: i32) -> (i32, i32) {
    %c0_i32 = arith.constant 0 : i32
    %c0_i32_0 = arith.constant 0 : i32
    %c0_i32_1 = arith.constant 0 : i32
    return %c0_i32, %c0_i32_0 : i32, i32
  }
  func.func @transform_3(%arg0: i32) -> (i32, i32) {
    %c0_i32 = arith.constant 0 : i32
    %c0_i32_0 = arith.constant 0 : i32
    %c0_i32_1 = arith.constant 0 : i32
    return %c0_i32, %c0_i32_0 : i32, i32
  }
  func.func @transform_4(%arg0: i32) -> (i32, i32) {
    %c0_i32 = arith.constant 0 : i32
    %c0_i32_0 = arith.constant 0 : i32
    %c0_i32_1 = arith.constant 0 : i32
    return %c0_i32, %c0_i32_0 : i32, i32
  }
  func.func @transform_5(%arg0: i32) -> (i32, i32) {
    %c0_i32 = arith.constant 0 : i32
    %c0_i32_0 = arith.constant 0 : i32
    %c0_i32_1 = arith.constant 0 : i32
    return %c0_i32, %c0_i32_0 : i32, i32
  }
  func.func @transform_6(%arg0: i32) -> (i32, i32, i32) {
    %c0_i32 = arith.constant 0 : i32
    %c0_i32_0 = arith.constant 0 : i32
    %c0_i32_1 = arith.constant 0 : i32
    return %arg0, %c0_i32, %c0_i32_0 : i32, i32, i32
  }
}

</mosaic_0001>

<llo_original>
// kernel: tpu_custom_call.1
$region0: #{tpu_custom_call.1}
  #allocation0 [shape = 'u32[]', space=smem, size = 0x4, offset = 0x4, fixed_abs, tag = 'smem constant byte address 0x4 - core index']
  #allocation1 [shape = 'u32[144,128]{1,0:T(1,128)}', space=vmem, size = 0x12000, scoped, tag = 'internal scratch']
  #allocation2 [shape = 'f32[8,362]{1,0:T(8,128)}', space=vmem, size = 0x3000, scoped, tag = 'scratch operand']
  %s0 = inlined_call_operand.hbm [shape: f32[2,8,324], index: 0, kind: input, shape index: {}]
  %s1 = inlined_call_operand.vmem [shape: f32[1,324], index: 1, kind: input, shape index: {}]
  %s2 = inlined_call_operand.vmem [shape: f32[8,72], index: 2, kind: input, shape index: {}]
  %s3 = inlined_call_operand.vmem [shape: f32[8,1], index: 3, kind: input, shape index: {}]
  %s4 = inlined_call_operand.vmem [shape: f32[8,72], index: 4, kind: input, shape index: {}]
  %s5 = inlined_call_operand.vmem [shape: f32[8,1], index: 5, kind: input, shape index: {}]
  %s6 = inlined_call_operand.hbm [shape: f32[2,8,324], index: 6, kind: output, shape index: {}]
  %s7 = sld [smem:[#allocation0]]
  $region61: #{tpu_custom_call.1} parent=0
    _
  %s9 = ssub.s32 1, %s7
  %s10 = scalar_select 0, %s9, %s7
  $region1: #{tpu_custom_call.1} parent=0
    #allocation3 [shape = 'u8[24576]{0}', space=vmem, size = 0x6000, scoped, tag = 'input window, operand 0']
    #allocation4 [shape = 's32[2]{0}', space=sflag, size = 0x8, scoped, tag = 'scoped memory for tpu_custom_call.1']
    #allocation5 [shape = 's32[2]{0}', space=sflag, size = 0x8, scoped, tag = 'scoped memory for tpu_custom_call.1']
    #allocation6 [shape = 'u8[24576]{0}', space=vmem, size = 0x6000, scoped, tag = 'output window, operand 0']
    %11 = vsyncpa [#allocation4], 0
    %s12 = scalar_lea.sflag [#allocation4], 1
    %13 = vsyncpa %s12, 0
    %14 = vsyncpa [#allocation5], 0
    %s15 = scalar_lea.sflag [#allocation5], 1
    %16 = vsyncpa %s15, 0
    loop: start=0, step=1, limit=4
    $region2: #{tpu_custom_call.1} parent=1 // loop_pre_header
      _
    $region3: #{tpu_custom_call.1} parent=1 // loop_header
      %s18 = sphi 0, %s22
      %p19 = scmp.ge.s32.totalorder %s18, 4
      %s28 = sphi 0, %s30
      %s31 = sphi 0, %s28
      %s32 = sphi 0, %s31
      %s48 = sphi 0, %s32
      %s52 = sphi 0, %s52
      %s54 = sphi 0, %s52
      %s55 = sphi 0, %s54
      %s69 = sphi 0, %s55
      %s73 = sphi 0, %s73
      %s75 = sphi 0, %s73
      %s76 = sphi 0, %s75
      %s90 = sphi 0, %s76
      %s94 = sphi 0, %s94
      %s96 = sphi 0, %s94
      %s97 = sphi 0, %s96
      %s111 = sphi 0, %s97
      %s115 = sphi 0, %s115
      %s117 = sphi 0, %s115
      %s118 = sphi 0, %s117
      %s132 = sphi 0, %s118
      %s136 = sphi 0, %s136
      %s138 = sphi 0, %s136
      %s139 = sphi 0, %s138
      %s153 = sphi 0, %s139
      %s159 = sphi 0, %s161
      %s162 = sphi 0, %s159
      %s163 = sphi 0, %s162
      %s179 = sphi 0, %s163
    $region4: #{tpu_custom_call.1} parent=1 // loop_header_branch
      %21 = sbr.rel (%p19) target = $region8
    $region5: #{tpu_custom_call.1} parent=1 // loop_body
      %s23 = ssub.s32 %s18, 1
      %s24 = ssub.s32 %s18, 2
      %s25 = sadd.s32 %s18, 1
      %s26 = ssub.s32 %s18, %s25
      %p27 = scmp.eq.s32.totalorder %s26, 0
      %s29 = sadd.s32 %s28, 1
      %s30 = scalar_select %p27, %s28, %s29
      %p33 = pneg %p27
      %p34 = scmp.eq.s32.totalorder %s18, 1
      %p35 = por %p33, %p34
      %p36 = scmp.ne.s32.totalorder %s28, %s31
      %p37 = scmp.eq.s32.totalorder %s18, 0
      %p38 = por %p36, %p37
      %p39 = scmp.ne.s32.totalorder %s28, %s31
      %p40 = scmp.eq.s32.totalorder %s23, 1
      %p41 = por %p39, %p40
      %p42 = scmp.ne.s32.totalorder %s31, %s32
      %p43 = scmp.eq.s32.totalorder %s23, 0
      %p44 = por %p42, %p43
      %p45 = scmp.ne.s32.totalorder %s31, %s32
      %p46 = scmp.eq.s32.totalorder %s24, 1
      %p47 = por %p45, %p46
      %p49 = scmp.ne.s32.totalorder %s32, %s48
      %p50 = scmp.eq.s32.totalorder %s24, 0
      %p51 = por %p49, %p50
      %s53 = sadd.s32 %s52, 1
      %p56 = scmp.eq.s32.totalorder %s18, 1
      %p57 = scmp.ne.s32.totalorder %s52, %s54
      %p58 = scmp.eq.s32.totalorder %s18, 0
      %p59 = por %p57, %p58
      %p60 = scmp.ne.s32.totalorder %s52, %s54
      %p61 = scmp.eq.s32.totalorder %s23, 1
      %p62 = por %p60, %p61
      %p63 = scmp.ne.s32.totalorder %s54, %s55
      %p64 = scmp.eq.s32.totalorder %s23, 0
      %p65 = por %p63, %p64
      %p66 = scmp.ne.s32.totalorder %s54, %s55
      %p67 = scmp.eq.s32.totalorder %s24, 1
      %p68 = por %p66, %p67
      %p70 = scmp.ne.s32.totalorder %s55, %s69
      %p71 = scmp.eq.s32.totalorder %s24, 0
      %p72 = por %p70, %p71
      %s74 = sadd.s32 %s73, 1
      %p77 = scmp.eq.s32.totalorder %s18, 1
      %p78 = scmp.ne.s32.totalorder %s73, %s75
      %p79 = scmp.eq.s32.totalorder %s18, 0
      %p80 = por %p78, %p79
      %p81 = scmp.ne.s32.totalorder %s73, %s75
      %p82 = scmp.eq.s32.totalorder %s23, 1
      %p83 = por %p81, %p82
      %p84 = scmp.ne.s32.totalorder %s75, %s76
      %p85 = scmp.eq.s32.totalorder %s23, 0
      %p86 = por %p84, %p85
      %p87 = scmp.ne.s32.totalorder %s75, %s76
      %p88 = scmp.eq.s32.totalorder %s24, 1
      %p89 = por %p87, %p88
      %p91 = scmp.ne.s32.totalorder %s76, %s90
      %p92 = scmp.eq.s32.totalorder %s24, 0
      %p93 = por %p91, %p92
      %s95 = sadd.s32 %s94, 1
      %p98 = scmp.eq.s32.totalorder %s18, 1
      %p99 = scmp.ne.s32.totalorder %s94, %s96
      %p100 = scmp.eq.s32.totalorder %s18, 0
      %p101 = por %p99, %p100
      %p102 = scmp.ne.s32.totalorder %s94, %s96
      %p103 = scmp.eq.s32.totalorder %s23, 1
      %p104 = por %p102, %p103
      %p105 = scmp.ne.s32.totalorder %s96, %s97
      %p106 = scmp.eq.s32.totalorder %s23, 0
      %p107 = por %p105, %p106
      %p108 = scmp.ne.s32.totalorder %s96, %s97
      %p109 = scmp.eq.s32.totalorder %s24, 1
      %p110 = por %p108, %p109
      %p112 = scmp.ne.s32.totalorder %s97, %s111
      %p113 = scmp.eq.s32.totalorder %s24, 0
      %p114 = por %p112, %p113
      %s116 = sadd.s32 %s115, 1
      %p119 = scmp.eq.s32.totalorder %s18, 1
      %p120 = scmp.ne.s32.totalorder %s115, %s117
      %p121 = scmp.eq.s32.totalorder %s18, 0
      %p122 = por %p120, %p121
      %p123 = scmp.ne.s32.totalorder %s115, %s117
      %p124 = scmp.eq.s32.totalorder %s23, 1
      %p125 = por %p123, %p124
      %p126 = scmp.ne.s32.totalorder %s117, %s118
      %p127 = scmp.eq.s32.totalorder %s23, 0
      %p128 = por %p126, %p127
      %p129 = scmp.ne.s32.totalorder %s117, %s118
      %p130 = scmp.eq.s32.totalorder %s24, 1
      %p131 = por %p129, %p130
      %p133 = scmp.ne.s32.totalorder %s118, %s132
      %p134 = scmp.eq.s32.totalorder %s24, 0
      %p135 = por %p133, %p134
      %s137 = sadd.s32 %s136, 1
      %p140 = scmp.eq.s32.totalorder %s18, 1
      %p141 = scmp.ne.s32.totalorder %s136, %s138
      %p142 = scmp.eq.s32.totalorder %s18, 0
      %p143 = por %p141, %p142
      %p144 = scmp.ne.s32.totalorder %s136, %s138
      %p145 = scmp.eq.s32.totalorder %s23, 1
      %p146 = por %p144, %p145
      %p147 = scmp.ne.s32.totalorder %s138, %s139
      %p148 = scmp.eq.s32.totalorder %s23, 0
      %p149 = por %p147, %p148
      %p150 = scmp.ne.s32.totalorder %s138, %s139
      %p151 = scmp.eq.s32.totalorder %s24, 1
      %p152 = por %p150, %p151
      %p154 = scmp.ne.s32.totalorder %s139, %s153
      %p155 = scmp.eq.s32.totalorder %s24, 0
      %p156 = por %p154, %p155
      %s157 = ssub.s32 %s18, %s25
      %p158 = scmp.eq.s32.totalorder %s157, 0
      %s160 = sadd.s32 %s159, 1
      %s161 = scalar_select %p158, %s159, %s160
      %p164 = pneg %p158
      %p165 = scmp.eq.s32.totalorder %s18, 1
      %p166 = por %p164, %p165
      %p167 = scmp.ne.s32.totalorder %s159, %s162
      %p168 = scmp.eq.s32.totalorder %s18, 0
      %p169 = por %p167, %p168
      %p170 = scmp.ne.s32.totalorder %s159, %s162
      %p171 = scmp.eq.s32.totalorder %s23, 1
      %p172 = por %p170, %p171
      %p173 = scmp.ne.s32.totalorder %s162, %s163
      %p174 = scmp.eq.s32.totalorder %s23, 0
      %p175 = por %p173, %p174
      %p176 = scmp.ne.s32.totalorder %s162, %s163
      %p177 = scmp.eq.s32.totalorder %s24, 1
      %p178 = por %p176, %p177
      %p180 = scmp.ne.s32.totalorder %s163, %s179
      %p181 = scmp.eq.s32.totalorder %s24, 0
      %p182 = por %p180, %p181
      %p183 = scmp.le.s32.totalorder 1, %s18
      %p184 = scmp.lt.s32.totalorder %s18, 3
      %p185 = pnand %p183, %p184
      %p186 = pneg %p185
      // Predicated region
      $region9: #{tpu_custom_call.1} parent=5 // pred_check
        _
      $region10: #{tpu_custom_call.1} parent=5 // pred_check_branch
        %188 = sbr.rel (%p185) target = $region12
      $region11: #{tpu_custom_call.1} parent=5 // pred_region
        %s189 = ssub.s32 %s18, 1
        // Predicated region
        $region13: #{tpu_custom_call.1} parent=11 // pred_check
          %p190 = pneg %p65
        $region14: #{tpu_custom_call.1} parent=11 // pred_check_branch
          %192 = sbr.rel (%p190) target = $region16
        $region15: #{tpu_custom_call.1} parent=11 // pred_region
          _
        $region16: #{tpu_custom_call.1} parent=11 // pred_fallthru
          _
        // Predicated region
        $region17: #{tpu_custom_call.1} parent=11 // pred_check
          %p193 = pneg %p86
        $region18: #{tpu_custom_call.1} parent=11 // pred_check_branch
          %195 = sbr.rel (%p193) target = $region20
        $region19: #{tpu_custom_call.1} parent=11 // pred_region
          _
        $region20: #{tpu_custom_call.1} parent=11 // pred_fallthru
          _
        // Predicated region
        $region21: #{tpu_custom_call.1} parent=11 // pred_check
          %p196 = pneg %p107
        $region22: #{tpu_custom_call.1} parent=11 // pred_check_branch
          %198 = sbr.rel (%p196) target = $region24
        $region23: #{tpu_custom_call.1} parent=11 // pred_region
          _
        $region24: #{tpu_custom_call.1} parent=11 // pred_fallthru
          _
        // Predicated region
        $region25: #{tpu_custom_call.1} parent=11 // pred_check
          %p199 = pneg %p128
        $region26: #{tpu_custom_call.1} parent=11 // pred_check_branch
          %201 = sbr.rel (%p199) target = $region28
        $region27: #{tpu_custom_call.1} parent=11 // pred_region
          _
        $region28: #{tpu_custom_call.1} parent=11 // pred_fallthru
          _
        // Predicated region
        $region29: #{tpu_custom_call.1} parent=11 // pred_check
          %p202 = pneg %p149
        $region30: #{tpu_custom_call.1} parent=11 // pred_check_branch
          %204 = sbr.rel (%p202) target = $region32
        $region31: #{tpu_custom_call.1} parent=11 // pred_region
          _
        $region32: #{tpu_custom_call.1} parent=11 // pred_fallthru
          _
      $region12: #{tpu_custom_call.1} parent=5 // pred_fallthru
        _
      %p205 = scmp.lt.s32.totalorder %s18, 2
      // Predicated region
      $region33: #{tpu_custom_call.1} parent=5 // pred_check
        %p206 = pneg %p205
      $region34: #{tpu_custom_call.1} parent=5 // pred_check_branch
        %208 = sbr.rel (%p206) target = $region36
      $region35: #{tpu_custom_call.1} parent=5 // pred_region
        // Predicated region
        $region37: #{tpu_custom_call.1} parent=35 // pred_check
          %p209 = pneg %p38
        $region38: #{tpu_custom_call.1} parent=35 // pred_check_branch
          %211 = sbr.rel (%p209) target = $region40
        $region39: #{tpu_custom_call.1} parent=35 // pred_region
          %s212 = sand.u32 %s28, 1
          %s213 = scalar_lea.sflag [#allocation4], %s212
          %s214 = sand.u32 %s28, 1
          %s215 = smul.addr %s214, 24
          %s216 = scalar_lea.vmem [#allocation3], %s215
          %s218 = ssub.s32 384, 384
          %219 = vsyncadd %s213, %s218
          %s220 = smul.addr %s18, 3
          %s221 = smul.addr %s220, 128
          %s222 = scalar_lea.hbm %s0, %s221
          %s224 = sshll.u32 %s216, 4
          %s225 = int_to_ptr.vmem [resolvable:$true] %s224
          %227 = dma.hbm_to_vmem [thread:$0]  %s222, 384, %s225, %s213
        $region40: #{tpu_custom_call.1} parent=35 // pred_fallthru
          _
      $region36: #{tpu_custom_call.1} parent=5 // pred_fallthru
        _
      %p228 = scmp.le.s32.totalorder 1, %s18
      %p229 = scmp.lt.s32.totalorder %s18, 3
      %p230 = pnand %p228, %p229
      %p231 = pneg %p230
      // Predicated region
      $region41: #{tpu_custom_call.1} parent=5 // pred_check
        _
      $region42: #{tpu_custom_call.1} parent=5 // pred_check_branch
        %233 = sbr.rel (%p230) target = $region44
      $region43: #{tpu_custom_call.1} parent=5 // pred_region
        %s234 = ssub.s32 %s18, 1
        %s235 = sand.u32 %s31, 1
        %s236 = scalar_lea.sflag [#allocation4], %s235
        %s237 = sand.u32 %s31, 1
        %s238 = smul.addr %s237, 24
        %s239 = scalar_lea.vmem [#allocation3], %s238
        // Predicated region
        $region45: #{tpu_custom_call.1} parent=43 // pred_check
          %p240 = pneg %p44
        $region46: #{tpu_custom_call.1} parent=43 // pred_check_branch
          %242 = sbr.rel (%p240) target = $region48
        $region47: #{tpu_custom_call.1} parent=43 // pred_region
          %243 = dma.done %s236, 384
        $region48: #{tpu_custom_call.1} parent=43 // pred_fallthru
          _
        %s244 = sand.u32 %s31, 1
        %s245 = scalar_lea.sflag [#allocation4], %s244
        %s246 = sand.u32 %s31, 1
        %s247 = smul.addr %s246, 24
        %s248 = scalar_lea.vmem [#allocation3], %s247
        %p249 = pneg %p44
        %p250 = pneg %p41
        %p251 = pneg %p65
        %p252 = pneg %p62
        %p253 = pneg %p86
        %p254 = pneg %p83
        %p255 = pneg %p107
        %p256 = pneg %p104
        %p257 = pneg %p128
        %p258 = pneg %p125
        %p259 = pneg %p149
        %p260 = pneg %p146
        %p261 = pneg %p175
        %p262 = pneg %p172
        %s263 = sand.u32 %s162, 1
        %s264 = scalar_lea.sflag [#allocation5], %s263
        %s265 = sand.u32 %s162, 1
        %s266 = smul.addr %s265, 24
        %s267 = scalar_lea.vmem [#allocation6], %s266
        %268 = vst [vmem:[#allocation2] sm:$0xff] 0.0
        %269 = vst [vmem:[#allocation2 + $0x8] sm:$0xff] 0.0
        %vm270 = vcmask 867328
        %271 = vst.msk [vmem:[#allocation2 + $0x10] sm:$0xff] %vm270, 0.0
        %v272 = vld [vmem:[%s1] sm:$0x7]
        %v273 = vld [vmem:[%s239] sm:$0xff]
        %v274 = vld [vmem:[%s239 + $0x8] sm:$0xff]
        %v275 = vld [vmem:[%s239 + $0x10] sm:$0xff]
        %v276 = vld [vmem:[%s2] sm:$0xff]
        %v277 = vld [vmem:[%s3] sm:$0xff]
        %281 = vrot.lane.b32.xlu0 %v273, 19
        %v282 = vpop.permute.xlu0 %281
        %283 = vrot.lane.b32.xlu0 %v274, 19
        %v284 = vpop.permute.xlu0 %283
        %285 = vrot.lane.b32.xlu0 %v275, 19
        %v286 = vpop.permute.xlu0 %285
        %vm287 = vcmask 154624
        %v288 = vsel %vm287, %v282, %v284
        %v289 = vsel %vm287, %v284, %v286
        %vm293 = vcmask 1047704
        %294 = vst.msk [vmem:[#allocation2] sm:$0xff] %vm293, %v282
        %295 = vst [vmem:[#allocation2 + $0x8] sm:$0xff] %v288
        %vm296 = vcmask 711680
        %297 = vst.msk [vmem:[#allocation2 + $0x10] sm:$0xff] %vm296, %v289
        %v298 = vld [vmem:[#allocation2] sm:$0xff]
        %v299 = vld [vmem:[#allocation2 + $0x8] sm:$0xff]
        %v300 = vld [vmem:[#allocation2 + $0x10] sm:$0xff]
        %304 = vrot.lane.b32.xlu0 %v298, 127
        %v305 = vpop.permute.xlu0 %304
        %306 = vrot.lane.b32.xlu0 %v299, 127
        %v307 = vpop.permute.xlu0 %306
        %308 = vrot.lane.b32.xlu0 %v300, 127
        %v309 = vpop.permute.xlu0 %308
        %vm310 = vcmask 1039360
        %v311 = vsel %vm310, %v305, %v307
        %v312 = vsel %vm310, %v307, %v309
        %316 = vrot.lane.b32.xlu0 %v298, 126
        %v317 = vpop.permute.xlu0 %316
        %318 = vrot.lane.b32.xlu0 %v299, 126
        %v319 = vpop.permute.xlu0 %318
        %320 = vrot.lane.b32.xlu0 %v300, 126
        %v321 = vpop.permute.xlu0 %320
        %vm322 = vcmask 1031168
        %v323 = vsel %vm322, %v317, %v319
        %v324 = vsel %vm322, %v319, %v321
        %328 = vrot.lane.b32.xlu0 %v298, 110
        %v329 = vpop.permute.xlu0 %328
        %330 = vrot.lane.b32.xlu0 %v299, 110
        %v331 = vpop.permute.xlu0 %330
        %332 = vrot.lane.b32.xlu0 %v300, 110
        %v333 = vpop.permute.xlu0 %332
        %vm334 = vcmask 900096
        %v335 = vsel %vm334, %v329, %v331
        %v336 = vsel %vm334, %v331, %v333
        %340 = vrot.lane.b32.xlu0 %v298, 109
        %v341 = vpop.permute.xlu0 %340
        %342 = vrot.lane.b32.xlu0 %v299, 109
        %v343 = vpop.permute.xlu0 %342
        %344 = vrot.lane.b32.xlu0 %v300, 109
        %v345 = vpop.permute.xlu0 %344
        %vm346 = vcmask 891904
        %v347 = vsel %vm346, %v341, %v343
        %v348 = vsel %vm346, %v343, %v345
        %352 = vrot.lane.b32.xlu0 %v298, 108
        %v353 = vpop.permute.xlu0 %352
        %354 = vrot.lane.b32.xlu0 %v299, 108
        %v355 = vpop.permute.xlu0 %354
        %356 = vrot.lane.b32.xlu0 %v300, 108
        %v357 = vpop.permute.xlu0 %356
        %vm358 = vcmask 883712
        %v359 = vsel %vm358, %v353, %v355
        %v360 = vsel %vm358, %v355, %v357
        %364 = vrot.lane.b32.xlu0 %v298, 92
        %v365 = vpop.permute.xlu0 %364
        %366 = vrot.lane.b32.xlu0 %v299, 92
        %v367 = vpop.permute.xlu0 %366
        %368 = vrot.lane.b32.xlu0 %v300, 92
        %v369 = vpop.permute.xlu0 %368
        %vm370 = vcmask 752640
        %v371 = vsel %vm370, %v365, %v367
        %v372 = vsel %vm370, %v367, %v369
        %376 = vrot.lane.b32.xlu0 %v298, 91
        %v377 = vpop.permute.xlu0 %376
        %378 = vrot.lane.b32.xlu0 %v299, 91
        %v379 = vpop.permute.xlu0 %378
        %380 = vrot.lane.b32.xlu0 %v300, 91
        %v381 = vpop.permute.xlu0 %380
        %vm382 = vcmask 744448
        %v383 = vsel %vm382, %v377, %v379
        %v384 = vsel %vm382, %v379, %v381
        %388 = vrot.lane.b32.xlu0 %v298, 90
        %v389 = vpop.permute.xlu0 %388
        %390 = vrot.lane.b32.xlu0 %v299, 90
        %v391 = vpop.permute.xlu0 %390
        %392 = vrot.lane.b32.xlu0 %v300, 90
        %v393 = vpop.permute.xlu0 %392
        %vm394 = vcmask 736256
        %v395 = vsel %vm394, %v389, %v391
        %v396 = vsel %vm394, %v391, %v393
        %401 = vset.pattern.permute.xlu0 0
        %402 = vperm.xlu0 %401, %v277
        %v403 = vpop.permute.xlu0 %402
        %vm405 = vcmask 588800
        %v407 = vsel %vm405, %v276, 0
        %409 = vmatprep.subr.mxu0 0.0
        %410 = vmatpush1.msra.mxu0 0.0
        %411 = vmatprep.subr.mxu0 0.0
        %412 = vmatpush1.msra.mxu0 0.0
        %413 = vmatprep.subr.mxu0 0.0
        %414 = vmatpush1.msra.mxu0 0.0
        %415 = vmatprep.subr.mxu0 0.0
        %416 = vmatpush1.msra.mxu0 0.0
        %417 = vmatprep.subr.mxu0 0.0
        %418 = vmatpush1.msra.mxu0 0.0
        %419 = vmatprep.subr.mxu0 0.0
        %420 = vmatpush1.msra.mxu0 0.0
        %421 = vmatprep.subr.mxu0 0.0
        %422 = vmatpush1.msra.mxu0 0.0
        %423 = vmatprep.subr.mxu0 %v396
        %424 = vmatpush1.msra.mxu0 %v395
        %425 = vmatprep.subr.mxu0 %v384
        %426 = vmatpush1.msra.mxu0 %v383
        %427 = vmatprep.subr.mxu0 %v372
        %428 = vmatpush1.msra.mxu0 %v371
        %429 = vmatprep.subr.mxu0 %v360
        %430 = vmatpush1.msra.mxu0 %v359
        %431 = vmatprep.subr.mxu0 %v348
        %432 = vmatpush1.msra.mxu0 %v347
        %433 = vmatprep.subr.mxu0 %v336
        %434 = vmatpush1.msra.mxu0 %v335
        %435 = vmatprep.subr.mxu0 %v324
        %436 = vmatpush1.msra.mxu0 %v323
        %437 = vmatprep.subr.mxu0 %v312
        %438 = vmatpush1.msra.mxu0 %v311
        %439 = vmatprep.subr.mxu0 %v299
        %440 = vmatpush1.msra.mxu0 %v298
        %441 = vmatprep.subr.mxu0 0.0
        %442 = vmatpush2.msra.mxu0 0.0
        %443 = vmatprep.subr.mxu0 0.0
        %444 = vmatpush2.msra.mxu0 0.0
        %445 = vmatprep.subr.mxu0 0.0
        %446 = vmatpush2.msra.mxu0 0.0
        %447 = vmatprep.subr.mxu0 0.0
        %448 = vmatpush2.msra.mxu0 0.0
        %449 = vmatprep.subr.mxu0 0.0
        %450 = vmatpush2.msra.mxu0 0.0
        %451 = vmatprep.subr.mxu0 0.0
        %452 = vmatpush2.msra.mxu0 0.0
        %453 = vmatprep.subr.mxu0 0.0
        %454 = vmatpush2.msra.mxu0 0.0
        %455 = vmatprep.subr.mxu0 0.0
        %456 = vmatpush2.msra.mxu0 0.0
        %457 = vmatprep.subr.mxu0 0.0
        %458 = vmatpush2.msra.mxu0 0.0
        %459 = vmatprep.subr.mxu0 0.0
        %460 = vmatpush2.msra.mxu0 0.0
        %461 = vmatprep.subr.mxu0 0.0
        %462 = vmatpush2.msra.mxu0 0.0
        %463 = vmatprep.subr.mxu0 0.0
        %464 = vmatpush2.msra.mxu0 0.0
        %465 = vmatprep.subr.mxu0 0.0
        %466 = vmatpush2.msra.mxu0 0.0
        %467 = vmatprep.subr.mxu0 0.0
        %468 = vmatpush2.msra.mxu0 0.0
        %469 = vmatprep.subr.mxu0 0.0
        %470 = vmatpush2.msra.mxu0 0.0
        %471 = vmatprep.subr.mxu0 0.0
        %472 = vmatpush2.msra.mxu0 0.0
        %473 = vmatprep.mubr.f32.mxu0 0.0
        %474 = vmatmul.mubr.f32.gmra.mxu0 %v407
        %v475 = vpop.f32.mrf.mxu0
        %v476 = vadd.f32 %v403, %v475
        %v477 = vpop.f32.mrf.mxu0
        %v478 = vadd.f32 %v403, %v477
        %479 = vdwg.mxu0
        %480 = vmatprep.subr.mxu0 0.0
        %481 = vmatpush1.msra.mxu0 0.0
        %482 = vmatprep.subr.mxu0 0.0
        %483 = vmatpush1.msra.mxu0 0.0
        %484 = vmatprep.subr.mxu0 0.0
        %485 = vmatpush1.msra.mxu0 0.0
        %486 = vmatprep.subr.mxu0 0.0
        %487 = vmatpush1.msra.mxu0 0.0
        %488 = vmatprep.subr.mxu0 0.0
        %489 = vmatpush1.msra.mxu0 0.0
        %490 = vmatprep.subr.mxu0 0.0
        %491 = vmatpush1.msra.mxu0 0.0
        %492 = vmatprep.subr.mxu0 0.0
        %493 = vmatpush1.msra.mxu0 0.0
        %494 = vmatprep.subr.mxu0 0.0
        %495 = vmatpush1.msra.mxu0 %v393
        %496 = vmatprep.subr.mxu0 0.0
        %497 = vmatpush1.msra.mxu0 %v381
        %498 = vmatprep.subr.mxu0 0.0
        %499 = vmatpush1.msra.mxu0 %v369
        %500 = vmatprep.subr.mxu0 0.0
        %501 = vmatpush1.msra.mxu0 %v357
        %502 = vmatprep.subr.mxu0 0.0
        %503 = vmatpush1.msra.mxu0 %v345
        %504 = vmatprep.subr.mxu0 0.0
        %505 = vmatpush1.msra.mxu0 %v333
        %506 = vmatprep.subr.mxu0 0.0
        %507 = vmatpush1.msra.mxu0 %v321
        %508 = vmatprep.subr.mxu0 0.0
        %509 = vmatpush1.msra.mxu0 %v309
        %510 = vmatprep.subr.mxu0 0.0
        %511 = vmatpush1.msra.mxu0 %v300
        %512 = vmatprep.subr.mxu0 0.0
        %513 = vmatpush2.msra.mxu0 0.0
        %514 = vmatprep.subr.mxu0 0.0
        %515 = vmatpush2.msra.mxu0 0.0
        %516 = vmatprep.subr.mxu0 0.0
        %517 = vmatpush2.msra.mxu0 0.0
        %518 = vmatprep.subr.mxu0 0.0
        %519 = vmatpush2.msra.mxu0 0.0
        %520 = vmatprep.subr.mxu0 0.0
        %521 = vmatpush2.msra.mxu0 0.0
        %522 = vmatprep.subr.mxu0 0.0
        %523 = vmatpush2.msra.mxu0 0.0
        %524 = vmatprep.subr.mxu0 0.0
        %525 = vmatpush2.msra.mxu0 0.0
        %526 = vmatprep.subr.mxu0 0.0
        %527 = vmatpush2.msra.mxu0 0.0
        %528 = vmatprep.subr.mxu0 0.0
        %529 = vmatpush2.msra.mxu0 0.0
        %530 = vmatprep.subr.mxu0 0.0
        %531 = vmatpush2.msra.mxu0 0.0
        %532 = vmatprep.subr.mxu0 0.0
        %533 = vmatpush2.msra.mxu0 0.0
        %534 = vmatprep.subr.mxu0 0.0
        %535 = vmatpush2.msra.mxu0 0.0
        %536 = vmatprep.subr.mxu0 0.0
        %537 = vmatpush2.msra.mxu0 0.0
        %538 = vmatprep.subr.mxu0 0.0
        %539 = vmatpush2.msra.mxu0 0.0
        %540 = vmatprep.subr.mxu0 0.0
        %541 = vmatpush2.msra.mxu0 0.0
        %542 = vmatprep.subr.mxu0 0.0
        %543 = vmatpush2.msra.mxu0 0.0
        %544 = vmatprep.mubr.f32.mxu0 0.0
        %545 = vmatmul.mubr.f32.gmra.mxu0 %v407
        %v546 = vpop.f32.mrf.mxu0
        %v547 = vadd.f32 %v403, %v546
        %v548 = vpop.f32.mrf.mxu0
        %549 = vdwg.mxu0
        %v551 = vlaneseq
        %v552 = vshrl.u32 %v551, 7
        %v553 = vsub.s32 0, %v552
        %v554 = vrot.slane %v272, %v553
        %v555 = vlaneseq
        %v556 = vshrl.u32 %v555, 7
        %v557 = vsub.s32 1, %v556
        %v558 = vrot.slane %v272, %v557
        %v559 = vlaneseq
        %v560 = vshrl.u32 %v559, 7
        %v561 = vsub.s32 2, %v560
        %v562 = vrot.slane %v272, %v561
        %v566 = vmul.f32 %v476, %v554
        %v567 = vmul.f32 %v478, %v558
        %v568 = vmul.f32 %v547, %v562
        %v569 = vadd.f32 %v566, %v567
        %vm570 = vcmask 556032
        %v571 = vsel %vm570, %v568, 0.0
        %v572 = vadd.f32 %v569, %v571
        %573 = vadd.xlane.f32.xlu0 %v572
        %v574 = vpop.xlane.xlu0 %573
        %v575 = vmul.f32 %v574, 0.00390625
        %v576 = vsub.f32 %v476, %v575
        %v577 = vsub.f32 %v478, %v575
        %v578 = vsub.f32 %v547, %v575
        %v579 = vmul.f32 %v576, %v576
        %v580 = vmul.f32 %v577, %v577
        %v581 = vmul.f32 %v578, %v578
        %v582 = vmul.f32 %v579, %v554
        %v583 = vmul.f32 %v580, %v558
        %v584 = vmul.f32 %v581, %v562
        %v585 = vadd.f32 %v582, %v583
        %v586 = vsel %vm570, %v584, 0.0
        %v587 = vadd.f32 %v585, %v586
        %588 = vadd.xlane.f32.xlu0 %v587
        %v589 = vpop.xlane.xlu0 %588
        %v590 = vmul.f32 %v589, 0.00390625
        %v591 = vadd.f32 %v590, 1e-05
        %v592 = vrsqrt.pop %v591
        %v593 = vmul.f32 %v576, %v592
        %v594 = vmul.f32 %v577, %v592
        %v595 = vmul.f32 %v578, %v592
        %v596 = vmax.f32 %v593, 0.0
        %v597 = vmax.f32 %v594, 0.0
        %v598 = vmax.f32 %v595, 0.0
        %v599 = vmul.f32 %v596, %v554
        %v600 = vmul.f32 %v597, %v558
        %v601 = vmul.f32 %v598, %v562
        %v602 = vld [vmem:[%s4] sm:$0xff]
        %v603 = vld [vmem:[%s5] sm:$0xff]
        %607 = vrot.lane.b32.xlu0 %v599, 19
        %v608 = vpop.permute.xlu0 %607
        %609 = vrot.lane.b32.xlu0 %v600, 19
        %v610 = vpop.permute.xlu0 %609
        %611 = vrot.lane.b32.xlu0 %v601, 19
        %v612 = vpop.permute.xlu0 %611
        %v613 = vsel %vm287, %v608, %v610
        %v614 = vsel %vm287, %v610, %v612
        %618 = vst.msk [vmem:[#allocation2] sm:$0xff] %vm293, %v608
        %619 = vst [vmem:[#allocation2 + $0x8] sm:$0xff] %v613
        %620 = vst.msk [vmem:[#allocation2 + $0x10] sm:$0xff] %vm296, %v614
        %v621 = vld [vmem:[#allocation2] sm:$0xff]
        %v622 = vld [vmem:[#allocation2 + $0x8] sm:$0xff]
        %v623 = vld [vmem:[#allocation2 + $0x10] sm:$0xff]
        %627 = vrot.lane.b32.xlu0 %v621, 127
        %v628 = vpop.permute.xlu0 %627
        %629 = vrot.lane.b32.xlu0 %v622, 127
        %v630 = vpop.permute.xlu0 %629
        %631 = vrot.lane.b32.xlu0 %v623, 127
        %v632 = vpop.permute.xlu0 %631
        %v633 = vsel %vm310, %v628, %v630
        %v634 = vsel %vm310, %v630, %v632
        %638 = vrot.lane.b32.xlu0 %v621, 126
        %v639 = vpop.permute.xlu0 %638
        %640 = vrot.lane.b32.xlu0 %v622, 126
        %v641 = vpop.permute.xlu0 %640
        %642 = vrot.lane.b32.xlu0 %v623, 126
        %v643 = vpop.permute.xlu0 %642
        %v644 = vsel %vm322, %v639, %v641
        %v645 = vsel %vm322, %v641, %v643
        %649 = vrot.lane.b32.xlu0 %v621, 110
        %v650 = vpop.permute.xlu0 %649
        %651 = vrot.lane.b32.xlu0 %v622, 110
        %v652 = vpop.permute.xlu0 %651
        %653 = vrot.lane.b32.xlu0 %v623, 110
        %v654 = vpop.permute.xlu0 %653
        %v655 = vsel %vm334, %v650, %v652
        %v656 = vsel %vm334, %v652, %v654
        %660 = vrot.lane.b32.xlu0 %v621, 109
        %v661 = vpop.permute.xlu0 %660
        %662 = vrot.lane.b32.xlu0 %v622, 109
        %v663 = vpop.permute.xlu0 %662
        %664 = vrot.lane.b32.xlu0 %v623, 109
        %v665 = vpop.permute.xlu0 %664
        %v666 = vsel %vm346, %v661, %v663
        %v667 = vsel %vm346, %v663, %v665
        %671 = vrot.lane.b32.xlu0 %v621, 108
        %v672 = vpop.permute.xlu0 %671
        %673 = vrot.lane.b32.xlu0 %v622, 108
        %v674 = vpop.permute.xlu0 %673
        %675 = vrot.lane.b32.xlu0 %v623, 108
        %v676 = vpop.permute.xlu0 %675
        %v677 = vsel %vm358, %v672, %v674
        %v678 = vsel %vm358, %v674, %v676
        %682 = vrot.lane.b32.xlu0 %v621, 92
        %v683 = vpop.permute.xlu0 %682
        %684 = vrot.lane.b32.xlu0 %v622, 92
        %v685 = vpop.permute.xlu0 %684
        %686 = vrot.lane.b32.xlu0 %v623, 92
        %v687 = vpop.permute.xlu0 %686
        %v688 = vsel %vm370, %v683, %v685
        %v689 = vsel %vm370, %v685, %v687
        %693 = vrot.lane.b32.xlu0 %v621, 91
        %v694 = vpop.permute.xlu0 %693
        %695 = vrot.lane.b32.xlu0 %v622, 91
        %v696 = vpop.permute.xlu0 %695
        %697 = vrot.lane.b32.xlu0 %v623, 91
        %v698 = vpop.permute.xlu0 %697
        %v699 = vsel %vm382, %v694, %v696
        %v700 = vsel %vm382, %v696, %v698
        %704 = vrot.lane.b32.xlu0 %v621, 90
        %v705 = vpop.permute.xlu0 %704
        %706 = vrot.lane.b32.xlu0 %v622, 90
        %v707 = vpop.permute.xlu0 %706
        %708 = vrot.lane.b32.xlu0 %v623, 90
        %v709 = vpop.permute.xlu0 %708
        %v710 = vsel %vm394, %v705, %v707
        %v711 = vsel %vm394, %v707, %v709
        %716 = vset.pattern.permute.xlu0 0
        %717 = vperm.xlu0 %716, %v603
        %v718 = vpop.permute.xlu0 %717
        %v721 = vsel %vm405, %v602, 0
        %723 = vmatprep.subr.mxu0 0.0
        %724 = vmatpush1.msra.mxu0 0.0
        %725 = vmatprep.subr.mxu0 0.0
        %726 = vmatpush1.msra.mxu0 0.0
        %727 = vmatprep.subr.mxu0 0.0
        %728 = vmatpush1.msra.mxu0 0.0
        %729 = vmatprep.subr.mxu0 0.0
        %730 = vmatpush1.msra.mxu0 0.0
        %731 = vmatprep.subr.mxu0 0.0
        %732 = vmatpush1.msra.mxu0 0.0
        %733 = vmatprep.subr.mxu0 0.0
        %734 = vmatpush1.msra.mxu0 0.0
        %735 = vmatprep.subr.mxu0 0.0
        %736 = vmatpush1.msra.mxu0 0.0
        %737 = vmatprep.subr.mxu0 %v711
        %738 = vmatpush1.msra.mxu0 %v710
        %739 = vmatprep.subr.mxu0 %v700
        %740 = vmatpush1.msra.mxu0 %v699
        %741 = vmatprep.subr.mxu0 %v689
        %742 = vmatpush1.msra.mxu0 %v688
        %743 = vmatprep.subr.mxu0 %v678
        %744 = vmatpush1.msra.mxu0 %v677
        %745 = vmatprep.subr.mxu0 %v667
        %746 = vmatpush1.msra.mxu0 %v666
        %747 = vmatprep.subr.mxu0 %v656
        %748 = vmatpush1.msra.mxu0 %v655
        %749 = vmatprep.subr.mxu0 %v645
        %750 = vmatpush1.msra.mxu0 %v644
        %751 = vmatprep.subr.mxu0 %v634
        %752 = vmatpush1.msra.mxu0 %v633
        %753 = vmatprep.subr.mxu0 %v622
        %754 = vmatpush1.msra.mxu0 %v621
        %755 = vmatprep.subr.mxu0 0.0
        %756 = vmatpush2.msra.mxu0 0.0
        %757 = vmatprep.subr.mxu0 0.0
        %758 = vmatpush2.msra.mxu0 0.0
        %759 = vmatprep.subr.mxu0 0.0
        %760 = vmatpush2.msra.mxu0 0.0
        %761 = vmatprep.subr.mxu0 0.0
        %762 = vmatpush2.msra.mxu0 0.0
        %763 = vmatprep.subr.mxu0 0.0
        %764 = vmatpush2.msra.mxu0 0.0
        %765 = vmatprep.subr.mxu0 0.0
        %766 = vmatpush2.msra.mxu0 0.0
        %767 = vmatprep.subr.mxu0 0.0
        %768 = vmatpush2.msra.mxu0 0.0
        %769 = vmatprep.subr.mxu0 0.0
        %770 = vmatpush2.msra.mxu0 0.0
        %771 = vmatprep.subr.mxu0 0.0
        %772 = vmatpush2.msra.mxu0 0.0
        %773 = vmatprep.subr.mxu0 0.0
        %774 = vmatpush2.msra.mxu0 0.0
        %775 = vmatprep.subr.mxu0 0.0
        %776 = vmatpush2.msra.mxu0 0.0
        %777 = vmatprep.subr.mxu0 0.0
        %778 = vmatpush2.msra.mxu0 0.0
        %779 = vmatprep.subr.mxu0 0.0
        %780 = vmatpush2.msra.mxu0 0.0
        %781 = vmatprep.subr.mxu0 0.0
        %782 = vmatpush2.msra.mxu0 0.0
        %783 = vmatprep.subr.mxu0 0.0
        %784 = vmatpush2.msra.mxu0 0.0
        %785 = vmatprep.subr.mxu0 0.0
        %786 = vmatpush2.msra.mxu0 0.0
        %787 = vmatprep.mubr.f32.mxu0 0.0
        %788 = vmatmul.mubr.f32.gmra.mxu0 %v721
        %v789 = vpop.f32.mrf.mxu0
        %v790 = vadd.f32 %v718, %v789
        %v791 = vpop.f32.mrf.mxu0
        %v792 = vadd.f32 %v718, %v791
        %793 = vdwg.mxu0
        %794 = vmatprep.subr.mxu0 0.0
        %795 = vmatpush1.msra.mxu0 0.0
        %796 = vmatprep.subr.mxu0 0.0
        %797 = vmatpush1.msra.mxu0 0.0
        %798 = vmatprep.subr.mxu0 0.0
        %799 = vmatpush1.msra.mxu0 0.0
        %800 = vmatprep.subr.mxu0 0.0
        %801 = vmatpush1.msra.mxu0 0.0
        %802 = vmatprep.subr.mxu0 0.0
        %803 = vmatpush1.msra.mxu0 0.0
        %804 = vmatprep.subr.mxu0 0.0
        %805 = vmatpush1.msra.mxu0 0.0
        %806 = vmatprep.subr.mxu0 0.0
        %807 = vmatpush1.msra.mxu0 0.0
        %808 = vmatprep.subr.mxu0 0.0
        %809 = vmatpush1.msra.mxu0 %v709
        %810 = vmatprep.subr.mxu0 0.0
        %811 = vmatpush1.msra.mxu0 %v698
        %812 = vmatprep.subr.mxu0 0.0
        %813 = vmatpush1.msra.mxu0 %v687
        %814 = vmatprep.subr.mxu0 0.0
        %815 = vmatpush1.msra.mxu0 %v676
        %816 = vmatprep.subr.mxu0 0.0
        %817 = vmatpush1.msra.mxu0 %v665
        %818 = vmatprep.subr.mxu0 0.0
        %819 = vmatpush1.msra.mxu0 %v654
        %820 = vmatprep.subr.mxu0 0.0
        %821 = vmatpush1.msra.mxu0 %v643
        %822 = vmatprep.subr.mxu0 0.0
        %823 = vmatpush1.msra.mxu0 %v632
        %824 = vmatprep.subr.mxu0 0.0
        %825 = vmatpush1.msra.mxu0 %v623
        %826 = vmatprep.subr.mxu0 0.0
        %827 = vmatpush2.msra.mxu0 0.0
        %828 = vmatprep.subr.mxu0 0.0
        %829 = vmatpush2.msra.mxu0 0.0
        %830 = vmatprep.subr.mxu0 0.0
        %831 = vmatpush2.msra.mxu0 0.0
        %832 = vmatprep.subr.mxu0 0.0
        %833 = vmatpush2.msra.mxu0 0.0
        %834 = vmatprep.subr.mxu0 0.0
        %835 = vmatpush2.msra.mxu0 0.0
        %836 = vmatprep.subr.mxu0 0.0
        %837 = vmatpush2.msra.mxu0 0.0
        %838 = vmatprep.subr.mxu0 0.0
        %839 = vmatpush2.msra.mxu0 0.0
        %840 = vmatprep.subr.mxu0 0.0
        %841 = vmatpush2.msra.mxu0 0.0
        %842 = vmatprep.subr.mxu0 0.0
        %843 = vmatpush2.msra.mxu0 0.0
        %844 = vmatprep.subr.mxu0 0.0
        %845 = vmatpush2.msra.mxu0 0.0
        %846 = vmatprep.subr.mxu0 0.0
        %847 = vmatpush2.msra.mxu0 0.0
        %848 = vmatprep.subr.mxu0 0.0
        %849 = vmatpush2.msra.mxu0 0.0
        %850 = vmatprep.subr.mxu0 0.0
        %851 = vmatpush2.msra.mxu0 0.0
        %852 = vmatprep.subr.mxu0 0.0
        %853 = vmatpush2.msra.mxu0 0.0
        %854 = vmatprep.subr.mxu0 0.0
        %855 = vmatpush2.msra.mxu0 0.0
        %856 = vmatprep.subr.mxu0 0.0
        %857 = vmatpush2.msra.mxu0 0.0
        %858 = vmatprep.mubr.f32.mxu0 0.0
        %859 = vmatmul.mubr.f32.gmra.mxu0 %v721
        %v860 = vpop.f32.mrf.mxu0
        %v861 = vadd.f32 %v718, %v860
        %v862 = vpop.f32.mrf.mxu0
        %863 = vdwg.mxu0
        %v864 = vmul.f32 %v790, %v554
        %v865 = vmul.f32 %v792, %v558
        %v866 = vmul.f32 %v861, %v562
        %v867 = vadd.f32 %v864, %v865
        %v868 = vsel %vm570, %v866, 0.0
        %v869 = vadd.f32 %v867, %v868
        %870 = vadd.xlane.f32.xlu0 %v869
        %v871 = vpop.xlane.xlu0 %870
        %v872 = vmul.f32 %v871, 0.00390625
        %v873 = vsub.f32 %v790, %v872
        %v874 = vsub.f32 %v792, %v872
        %v875 = vsub.f32 %v861, %v872
        %v876 = vmul.f32 %v873, %v873
        %v877 = vmul.f32 %v874, %v874
        %v878 = vmul.f32 %v875, %v875
        %v879 = vmul.f32 %v876, %v554
        %v880 = vmul.f32 %v877, %v558
        %v881 = vmul.f32 %v878, %v562
        %v882 = vadd.f32 %v879, %v880
        %v883 = vsel %vm570, %v881, 0.0
        %v884 = vadd.f32 %v882, %v883
        %885 = vadd.xlane.f32.xlu0 %v884
        %v886 = vpop.xlane.xlu0 %885
        %v887 = vmul.f32 %v886, 0.00390625
        %v888 = vadd.f32 %v887, 1e-05
        %v889 = vrsqrt.pop %v888
        %v890 = vmul.f32 %v873, %v889
        %v891 = vmul.f32 %v874, %v889
        %v892 = vmul.f32 %v875, %v889
        %v893 = vmul.f32 %v890, %v554
        %v894 = vmul.f32 %v891, %v558
        %v895 = vmul.f32 %v892, %v562
        %v896 = vadd.f32 %v273, %v893
        %v897 = vadd.f32 %v274, %v894
        %v898 = vadd.f32 %v275, %v895
        %899 = vst [vmem:[%s267] sm:$0xff] %v896
        %900 = vst [vmem:[%s267 + $0x8] sm:$0xff] %v897
        %901 = vst.msk [vmem:[%s267 + $0x10] sm:$0xff] %vm570, %v898
        %s902 = sand.u32 %s162, 1
        %s903 = scalar_lea.sflag [#allocation5], %s902
        %s904 = sand.u32 %s162, 1
        %s905 = smul.addr %s904, 24
        %s906 = scalar_lea.vmem [#allocation6], %s905
        // Predicated region
        $region49: #{tpu_custom_call.1} parent=43 // pred_check
          %p907 = pneg %p172
        $region50: #{tpu_custom_call.1} parent=43 // pred_check_branch
          %909 = sbr.rel (%p907) target = $region52
        $region51: #{tpu_custom_call.1} parent=43 // pred_region
          %s911 = ssub.s32 384, 384
          %912 = vsyncadd %s903, %s911
          %s913 = smul.addr %s23, 3
          %s914 = smul.addr %s913, 128
          %s915 = scalar_lea.hbm %s6, %s914
          %s917 = sshll.u32 %s906, 4
          %s918 = int_to_ptr.vmem [resolvable:$true] %s917
          %920 = dma.vmem_to_hbm [thread:$0]  %s918, 384, %s915, %s903
        $region52: #{tpu_custom_call.1} parent=43 // pred_fallthru
          _
      $region44: #{tpu_custom_call.1} parent=5 // pred_fallthru
        _
      %p921 = scmp.le.s32.totalorder 2, %s18
      // Predicated region
      $region53: #{tpu_custom_call.1} parent=5 // pred_check
        %p922 = pneg %p921
      $region54: #{tpu_custom_call.1} parent=5 // pred_check_branch
        %924 = sbr.rel (%p922) target = $region56
      $region55: #{tpu_custom_call.1} parent=5 // pred_region
        %s925 = ssub.s32 %s18, 2
        // Predicated region
        $region57: #{tpu_custom_call.1} parent=55 // pred_check
          %p926 = pneg %p178
        $region58: #{tpu_custom_call.1} parent=55 // pred_check_branch
          %928 = sbr.rel (%p926) target = $region60
        $region59: #{tpu_custom_call.1} parent=55 // pred_region
          %s929 = sand.u32 %s163, 1
          %s930 = scalar_lea.sflag [#allocation5], %s929
          %s931 = sand.u32 %s163, 1
          %s932 = smul.addr %s931, 24
          %s933 = scalar_lea.vmem [#allocation6], %s932
          %934 = dma.done %s930, 384
        $region60: #{tpu_custom_call.1} parent=55 // pred_fallthru
          _
      $region56: #{tpu_custom_call.1} parent=5 // pred_fallthru
        _
    $region6: #{tpu_custom_call.1} parent=1 // loop_footer
      %s22 = sadd.s32 1, %s18
    $region7: #{tpu_custom_call.1} parent=1 // loop_footer_branch
      %17 = sbr.rel target = $region3
    $region8: #{tpu_custom_call.1} parent=1 // loop_exit
      _
    %935 = vsyncpa [#allocation4], 1
    %s936 = scalar_lea.sflag [#allocation4], 1
    %937 = vsyncpa %s936, 1
    %938 = vsyncpa [#allocation5], 1
    %s939 = scalar_lea.sflag [#allocation5], 1
    %940 = vsyncpa %s939, 1

</llo_original>
